<compile_context>
chip_gen: v7x
topology: tpu7x:2x2x1
jax: 0.10.0
libtpu: 0.0.40
codegen_flags: <defaults>
</compile_context>

<pallas_src>
import jax
import jax.numpy as jnp
from jax.experimental import pallas as pl
from jax.experimental.pallas import tpu as pltpu

EPS = 1e-6
_LANE_CANDIDATES = (1024, 512, 256, 128)


def _make_kernel(*, n_rows, wb, row_tile, group, bps, needs_mask):
    """Builds the partial-sum kernel for a (n_rows, wb) slab."""

    def kernel(b_ref, t_ref, g_ref, m_ref, acc_ref):
        c = pl.program_id(0)   # core split ("parallel")
        i = pl.program_id(1)   # row-block within the split ("arbitrary")

        @pl.when(i == 0)
        def _():
            acc_ref[...] = jnp.zeros_like(acc_ref)

        b = b_ref[...].astype(jnp.float32)
        t = t_ref[...].astype(jnp.float32)
        g = g_ref[...].astype(jnp.float32)
        m = m_ref[...].astype(jnp.float32)

        if needs_mask:
            # Logical (unclamped) first row of this block; rows >= n_rows are
            # garbage from partial / duplicated DMA blocks and must be zeroed.
            row0 = (c * bps + i) * row_tile
            if row_tile > 1:
                rid = row0 + jax.lax.broadcasted_iota(
                    jnp.int32, (row_tile, 1), 0)
            else:
                rid = row0
            valid = rid < n_rows
            b = jnp.where(valid, b, 0.0)
            t = jnp.where(valid, t, 0.0)
            g = jnp.where(valid, g, 0.0)
            m = jnp.where(valid, m, 0.0)

        gm = g * m

        def fold(x):
            # (row_tile, wb) -> (group, wb) via sublane-tile-aligned reshape
            # (a pure view) and leading-axis VPU adds; no cross-lane work.
            if row_tile == group:
                return x
            return x.reshape(row_tile // group, group, wb).sum(axis=0)

        acc_ref[0] += fold(b * gm)   # intersection (binary)
        acc_ref[1] += fold(b * m)    # pred sum     (binary)
        acc_ref[2] += fold(gm)       # gt*mask sum  (shared by both losses)
        acc_ref[3] += fold(t * gm)   # intersection (thresh_binary)
        acc_ref[4] += fold(t * m)    # pred sum     (thresh_binary)

    return kernel


def _dice_partial_sums(b, t, g, m, *, num_splits=2,
                       target_block_elems=256 * 1024):
    """Returns float32 partial sums of shape (num_splits, 5, group, wb)."""
    n_rows, wb = b.shape

    # Sublane tiling minimum across all input dtypes (8 f32, 16 bf16, 32 int8).
    sub = max(8, max(32 // x.dtype.itemsize for x in (b, t, g, m)))

    if n_rows <= sub:
        row_tile = n_rows                       # full-dim block (always legal)
    else:
        max_rows = (n_rows // sub) * sub
        desired = max(sub, (target_block_elems // wb) // sub * sub)
        row_tile = min(desired, max_rows, 2048)

    group = 8 if row_tile % 8 == 0 else row_tile
    nblocks = pl.cdiv(n_rows, row_tile)
    bps = pl.cdiv(nblocks, num_splits)          # row-blocks per core split
    needs_mask = (nblocks * row_tile != n_rows) or (bps * num_splits != nblocks)

    def in_index(c, i):
        blk = c * bps + i
        if needs_mask:
            # Clamp off-the-end blocks to the last valid block; their rows are
            # zeroed by the in-kernel validity mask.
            blk = jnp.minimum(blk, nblocks - 1)
        return (blk, 0)

    in_spec = pl.BlockSpec((row_tile, wb), in_index)
    out_spec = pl.BlockSpec((None, 5, group, wb), lambda c, i: (c, 0, 0, 0))

    kernel = _make_kernel(n_rows=n_rows, wb=wb, row_tile=row_tile, group=group,
                          bps=bps, needs_mask=needs_mask)

    bytes_accessed = sum(int(x.size) * x.dtype.itemsize for x in (b, t, g, m))
    bytes_accessed += num_splits * 5 * group * wb * 4
    cost = pl.CostEstimate(flops=10 * int(b.size), transcendentals=0,
                           bytes_accessed=int(bytes_accessed))

    return pl.pallas_call(
        kernel,
        out_shape=jax.ShapeDtypeStruct((num_splits, 5, group, wb), jnp.float32),
        grid_spec=pltpu.PrefetchScalarGridSpec(
            num_scalar_prefetch=0,
            grid=(num_splits, bps),
            in_specs=[in_spec, in_spec, in_spec, in_spec],
            out_specs=out_spec,
        ),
        compiler_params=pltpu.CompilerParams(
            dimension_semantics=("parallel", "arbitrary"),
            vmem_limit_bytes=32 * 1024 * 1024,
        ),
        cost_estimate=cost,
    )(b, t, g, m)


def adaptive_dice_loss(pred, batch, eps=EPS, *, num_splits=2,
                       target_block_elems=256 * 1024):
    binary = pred["binary"]
    thresh_binary = pred["thresh_binary"]
    gt = batch["gt"]
    mask = batch["mask"]

    # Mirror DiceLoss._compute: drop channel dim when pred is 4-D.
    if binary.ndim == 4:
        binary = binary[:, 0]
        thresh_binary = thresh_binary[:, 0]
        gt = gt[:, 0]
    if mask.ndim == 4:
        mask = mask[:, 0]

    # Lane-dense flattening: pick the largest lane width (multiple of 128) that
    # divides the element count; otherwise fall back to (B*H, W) full-dim rows.
    n = int(binary.size)
    wb = next((c for c in _LANE_CANDIDATES if n % c == 0), binary.shape[-1])
    rows = n // wb

    def as2d(x):
        return x.reshape(rows, wb)

    partials = _dice_partial_sums(
        as2d(binary), as2d(thresh_binary), as2d(gt), as2d(mask),
        num_splits=num_splits, target_block_elems=target_block_elems)
    sums = jnp.sum(partials, axis=(0, 2, 3))     # (5,) float32

    inter_b, pred_b, gt_sum, inter_t, pred_t = (sums[k] for k in range(5))
    main_loss = 1.0 - 2.0 * inter_b / (pred_b + gt_sum + eps)
    thresh_loss = 1.0 - 2.0 * inter_t / (pred_t + gt_sum + eps)
    loss = main_loss + thresh_loss
    return loss, dict(main_loss=main_loss, thresh_loss=thresh_loss)


def _reference(pred, batch, eps=EPS):
    def dice(p, g, m):
        if p.ndim == 4:
            p = p[:, 0]
            g = g[:, 0]
        if m.ndim == 4:
            m = m[:, 0]
        p = p.astype(jnp.float32)
        g = g.astype(jnp.float32)
        m = m.astype(jnp.float32)
        inter = jnp.sum(p * g * m)
        union = jnp.sum(p * m) + jnp.sum(g * m) + eps
        return 1.0 - 2.0 * inter / union

    main = dice(pred["binary"], batch["gt"], batch["mask"])
    thr = dice(pred["thresh_binary"], batch["gt"], batch["mask"])
    return main + thr, main, thr


def _make_inputs(key, b, h, w, gt_dtype=jnp.float32, mask_dtype=jnp.float32):
    k1, k2, k3, k4 = jax.random.split(key, 4)
    binary = jax.nn.sigmoid(jax.random.normal(k1, (b, 1, h, w), jnp.float32))
    thresh = jax.nn.sigmoid(jax.random.normal(k2, (b, 1, h, w), jnp.float32))
    gt = (jax.random.uniform(k3, (b, 1, h, w)) > 0.5).astype(gt_dtype)
    mask = (jax.random.uniform(k4, (b, h, w)) > 0.1).astype(mask_dtype)
    return {"binary": binary, "thresh_binary": thresh}, {"gt": gt, "mask": mask}


def _check(pred, batch, **kw):
    loss, metrics = adaptive_dice_loss(pred, batch, **kw)
    loss = jax.block_until_ready(loss)
    ref_loss, ref_main, ref_thr = _reference(pred, batch)
    assert jnp.allclose(loss, ref_loss, rtol=1e-5, atol=1e-5), (loss, ref_loss)
    assert jnp.allclose(metrics["main_loss"], ref_main, rtol=1e-5, atol=1e-5)
    assert jnp.allclose(metrics["thresh_loss"], ref_thr, rtol=1e-5, atol=1e-5)
    return loss


if __name__ == "__main__":
    key = jax.random.PRNGKey(0)
    keys = jax.random.split(key, 4)

    # 1) Basic small NCHW case (B=2, C=1, 16x16): lane-dense (rows=1, wb=512).
    pred, batch = _make_inputs(keys[0], 2, 16, 16)
    _check(pred, batch)

    # 2) Ragged row count: exercises the in-kernel tail mask and the clamped
    #    duplicate block of the 2-way core split.
    pred, batch = _make_inputs(keys[1], 2, 42, 36)
    _check(pred, batch)

    # 3) Force many grid steps with a tiny block budget: exercises the VMEM
    #    accumulator across the pipelined inner axis on both splits (no mask).
    pred, batch = _make_inputs(keys[2], 2, 40, 36, )
    _check(pred, batch, target_block_elems=512)

    # 4) bf16 gt/mask ({0,1} exact) to cut HBM bytes; upcast happens in-kernel.
    pred, batch = _make_inputs(keys[3], 2, 64, 128,
                               gt_dtype=jnp.bfloat16, mask_dtype=jnp.bfloat16)
    _check(pred, batch)

    print("KERNEL_OK")
</pallas_src>

<mosaic_0001>
module attributes {stable_mosaic.version = 11 : i64} {
  func.func @kernel(%arg0: i32, %arg1: i32, %arg2: memref<1x512xf32, #tpu.memory_space<vmem>>, %arg3: memref<1x512xf32, #tpu.memory_space<vmem>>, %arg4: memref<1x512xf32, #tpu.memory_space<vmem>>, %arg5: memref<1x512xf32, #tpu.memory_space<vmem>>, %arg6: memref<1x5x1x512xf32, #tpu.memory_space<vmem>>) attributes {dimension_semantics = [#tpu.dimension_semantics<parallel>, #tpu.dimension_semantics<arbitrary>], iteration_bounds = array<i64: 2, 1>, scalar_prefetch = 0 : i64, scratch_operands = 0 : i64, tpu.core_type = #tpu.core_type<tc>, window_params = [{transform_indices = @transform_0, window_bounds = array<i64: 1, 512>}, {transform_indices = @transform_1, window_bounds = array<i64: 1, 512>}, {transform_indices = @transform_2, window_bounds = array<i64: 1, 512>}, {transform_indices = @transform_3, window_bounds = array<i64: 1, 512>}, {transform_indices = @transform_4, window_bounds = array<i64: 1, 5, 1, 512>}]} {
    %c0_i32 = arith.constant 0 : i32
    %0 = arith.cmpi eq, %arg1, %c0_i32 : i32
    %1 = arith.extui %0 : i1 to i32
    %c0_i32_0 = arith.constant 0 : i32
    %2 = arith.cmpi ne, %1, %c0_i32_0 : i32
    scf.if %2 {
      %cst_49 = arith.constant 0.000000e+00 : f32
      %54 = vector.broadcast %cst_49 : f32 to vector<5x1x512xf32>
      %c0_50 = arith.constant 0 : index
      %c0_51 = arith.constant 0 : index
      %c0_52 = arith.constant 0 : index
      %c0_53 = arith.constant 0 : index
      %55 = vector.load %arg6[%c0_50, %c0_51, %c0_52, %c0_53] : memref<1x5x1x512xf32, #tpu.memory_space<vmem>>, vector<1x5x1x512xf32>
      %56 = vector.shape_cast %55 : vector<1x5x1x512xf32> to vector<5x1x512xf32>
      %57 = vector.shape_cast %54 : vector<5x1x512xf32> to vector<1x5x1x512xf32>
      tpu.vector_store %arg6[%c0_50, %c0_51, %c0_52, %c0_53], %57 {strides = array<i32>} : memref<1x5x1x512xf32, #tpu.memory_space<vmem>>, vector<1x5x1x512xf32>,
    } else {
    }
    %c0 = arith.constant 0 : index
    %c0_1 = arith.constant 0 : index
    %3 = vector.load %arg2[%c0, %c0_1] : memref<1x512xf32, #tpu.memory_space<vmem>>, vector<1x512xf32>
    %c0_2 = arith.constant 0 : index
    %c0_3 = arith.constant 0 : index
    %4 = vector.load %arg3[%c0_2, %c0_3] : memref<1x512xf32, #tpu.memory_space<vmem>>, vector<1x512xf32>
    %c0_4 = arith.constant 0 : index
    %c0_5 = arith.constant 0 : index
    %5 = vector.load %arg4[%c0_4, %c0_5] : memref<1x512xf32, #tpu.memory_space<vmem>>, vector<1x512xf32>
    %c0_6 = arith.constant 0 : index
    %c0_7 = arith.constant 0 : index
    %6 = vector.load %arg5[%c0_6, %c0_7] : memref<1x512xf32, #tpu.memory_space<vmem>>, vector<1x512xf32>
    %c1_i32 = arith.constant 1 : i32
    %7 = arith.muli %arg0, %c1_i32 : i32
    %8 = arith.addi %7, %arg1 : i32
    %c1_i32_8 = arith.constant 1 : i32
    %9 = arith.muli %8, %c1_i32_8 : i32
    %c1_i32_9 = arith.constant 1 : i32
    %10 = arith.cmpi slt, %9, %c1_i32_9 : i32
    %cst = arith.constant 0.000000e+00 : f32
    %11 = vector.broadcast %cst : f32 to vector<1x512xf32>
    %12 = arith.select %10, %3, %11 : vector<1x512xf32>
    %cst_10 = arith.constant 0.000000e+00 : f32
    %13 = vector.broadcast %cst_10 : f32 to vector<1x512xf32>
    %14 = arith.select %10, %4, %13 : vector<1x512xf32>
    %cst_11 = arith.constant 0.000000e+00 : f32
    %15 = vector.broadcast %cst_11 : f32 to vector<1x512xf32>
    %16 = arith.select %10, %5, %15 : vector<1x512xf32>
    %cst_12 = arith.constant 0.000000e+00 : f32
    %17 = vector.broadcast %cst_12 : f32 to vector<1x512xf32>
    %18 = arith.select %10, %6, %17 : vector<1x512xf32>
    %19 = arith.mulf %16, %18 : vector<1x512xf32>
    %c0_13 = arith.constant 0 : index
    %c0_14 = arith.constant 0 : index
    %c0_15 = arith.constant 0 : index
    %c0_16 = arith.constant 0 : index
    %20 = vector.load %arg6[%c0_13, %c0_14, %c0_15, %c0_16] : memref<1x5x1x512xf32, #tpu.memory_space<vmem>>, vector<1x1x1x512xf32>
    %21 = vector.shape_cast %20 : vector<1x1x1x512xf32> to vector<1x512xf32>
    %22 = arith.mulf %12, %19 : vector<1x512xf32>
    %23 = arith.addf %21, %22 : vector<1x512xf32>
    %c0_17 = arith.constant 0 : index
    %c0_18 = arith.constant 0 : index
    %c0_19 = arith.constant 0 : index
    %c0_20 = arith.constant 0 : index
    %24 = vector.load %arg6[%c0_17, %c0_18, %c0_19, %c0_20] : memref<1x5x1x512xf32, #tpu.memory_space<vmem>>, vector<1x1x1x512xf32>
    %25 = vector.shape_cast %24 : vector<1x1x1x512xf32> to vector<1x512xf32>
    %26 = vector.shape_cast %23 : vector<1x512xf32> to vector<1x1x1x512xf32>
    tpu.vector_store %arg6[%c0_17, %c0_18, %c0_19, %c0_20], %26 {strides = array<i32>} : memref<1x5x1x512xf32, #tpu.memory_space<vmem>>, vector<1x1x1x512xf32>,
    %c0_21 = arith.constant 0 : index
    %c1 = arith.constant 1 : index
    %c0_22 = arith.constant 0 : index
    %c0_23 = arith.constant 0 : index
    %27 = vector.load %arg6[%c0_21, %c1, %c0_22, %c0_23] : memref<1x5x1x512xf32, #tpu.memory_space<vmem>>, vector<1x1x1x512xf32>
    %28 = vector.shape_cast %27 : vector<1x1x1x512xf32> to vector<1x512xf32>
    %29 = arith.mulf %12, %18 : vector<1x512xf32>
    %30 = arith.addf %28, %29 : vector<1x512xf32>
    %c0_24 = arith.constant 0 : index
    %c1_25 = arith.constant 1 : index
    %c0_26 = arith.constant 0 : index
    %c0_27 = arith.constant 0 : index
    %31 = vector.load %arg6[%c0_24, %c1_25, %c0_26, %c0_27] : memref<1x5x1x512xf32, #tpu.memory_space<vmem>>, vector<1x1x1x512xf32>
    %32 = vector.shape_cast %31 : vector<1x1x1x512xf32> to vector<1x512xf32>
    %33 = vector.shape_cast %30 : vector<1x512xf32> to vector<1x1x1x512xf32>
    tpu.vector_store %arg6[%c0_24, %c1_25, %c0_26, %c0_27], %33 {strides = array<i32>} : memref<1x5x1x512xf32, #tpu.memory_space<vmem>>, vector<1x1x1x512xf32>,
    %c0_28 = arith.constant 0 : index
    %c2 = arith.constant 2 : index
    %c0_29 = arith.constant 0 : index
    %c0_30 = arith.constant 0 : index
    %34 = vector.load %arg6[%c0_28, %c2, %c0_29, %c0_30] : memref<1x5x1x512xf32, #tpu.memory_space<vmem>>, vector<1x1x1x512xf32>
    %35 = vector.shape_cast %34 : vector<1x1x1x512xf32> to vector<1x512xf32>
    %36 = arith.addf %35, %19 : vector<1x512xf32>
    %c0_31 = arith.constant 0 : index
    %c2_32 = arith.constant 2 : index
    %c0_33 = arith.constant 0 : index
    %c0_34 = arith.constant 0 : index
    %37 = vector.load %arg6[%c0_31, %c2_32, %c0_33, %c0_34] : memref<1x5x1x512xf32, #tpu.memory_space<vmem>>, vector<1x1x1x512xf32>
    %38 = vector.shape_cast %37 : vector<1x1x1x512xf32> to vector<1x512xf32>
    %39 = vector.shape_cast %36 : vector<1x512xf32> to vector<1x1x1x512xf32>
    tpu.vector_store %arg6[%c0_31, %c2_32, %c0_33, %c0_34], %39 {strides = array<i32>} : memref<1x5x1x512xf32, #tpu.memory_space<vmem>>, vector<1x1x1x512xf32>,
    %c0_35 = arith.constant 0 : index
    %c3 = arith.constant 3 : index
    %c0_36 = arith.constant 0 : index
    %c0_37 = arith.constant 0 : index
    %40 = vector.load %arg6[%c0_35, %c3, %c0_36, %c0_37] : memref<1x5x1x512xf32, #tpu.memory_space<vmem>>, vector<1x1x1x512xf32>
    %41 = vector.shape_cast %40 : vector<1x1x1x512xf32> to vector<1x512xf32>
    %42 = arith.mulf %14, %19 : vector<1x512xf32>
    %43 = arith.addf %41, %42 : vector<1x512xf32>
    %c0_38 = arith.constant 0 : index
    %c3_39 = arith.constant 3 : index
    %c0_40 = arith.constant 0 : index
    %c0_41 = arith.constant 0 : index
    %44 = vector.load %arg6[%c0_38, %c3_39, %c0_40, %c0_41] : memref<1x5x1x512xf32, #tpu.memory_space<vmem>>, vector<1x1x1x512xf32>
    %45 = vector.shape_cast %44 : vector<1x1x1x512xf32> to vector<1x512xf32>
    %46 = vector.shape_cast %43 : vector<1x512xf32> to vector<1x1x1x512xf32>
    tpu.vector_store %arg6[%c0_38, %c3_39, %c0_40, %c0_41], %46 {strides = array<i32>} : memref<1x5x1x512xf32, #tpu.memory_space<vmem>>, vector<1x1x1x512xf32>,
    %c0_42 = arith.constant 0 : index
    %c4 = arith.constant 4 : index
    %c0_43 = arith.constant 0 : index
    %c0_44 = arith.constant 0 : index
    %47 = vector.load %arg6[%c0_42, %c4, %c0_43, %c0_44] : memref<1x5x1x512xf32, #tpu.memory_space<vmem>>, vector<1x1x1x512xf32>
    %48 = vector.shape_cast %47 : vector<1x1x1x512xf32> to vector<1x512xf32>
    %49 = arith.mulf %14, %18 : vector<1x512xf32>
    %50 = arith.addf %48, %49 : vector<1x512xf32>
    %c0_45 = arith.constant 0 : index
    %c4_46 = arith.constant 4 : index
    %c0_47 = arith.constant 0 : index
    %c0_48 = arith.constant 0 : index
    %51 = vector.load %arg6[%c0_45, %c4_46, %c0_47, %c0_48] : memref<1x5x1x512xf32, #tpu.memory_space<vmem>>, vector<1x1x1x512xf32>
    %52 = vector.shape_cast %51 : vector<1x1x1x512xf32> to vector<1x512xf32>
    %53 = vector.shape_cast %50 : vector<1x512xf32> to vector<1x1x1x512xf32>
    tpu.vector_store %arg6[%c0_45, %c4_46, %c0_47, %c0_48], %53 {strides = array<i32>} : memref<1x5x1x512xf32, #tpu.memory_space<vmem>>, vector<1x1x1x512xf32>,
    return
  }
  func.func @transform_0(%arg0: i32, %arg1: i32) -> (i32, i32) {
    %c1_i32 = arith.constant 1 : i32
    %0 = arith.muli %arg0, %c1_i32 : i32
    %1 = arith.addi %0, %arg1 : i32
    %c0_i32 = arith.constant 0 : i32
    %2 = arith.minsi %1, %c0_i32 : i32
    %c0_i32_0 = arith.constant 0 : i32
    %c0_i32_1 = arith.constant 0 : i32
    return %2, %c0_i32_0 : i32, i32
  }
  func.func @transform_1(%arg0: i32, %arg1: i32) -> (i32, i32) {
    %c1_i32 = arith.constant 1 : i32
    %0 = arith.muli %arg0, %c1_i32 : i32
    %1 = arith.addi %0, %arg1 : i32
    %c0_i32 = arith.constant 0 : i32
    %2 = arith.minsi %1, %c0_i32 : i32
    %c0_i32_0 = arith.constant 0 : i32
    %c0_i32_1 = arith.constant 0 : i32
    return %2, %c0_i32_0 : i32, i32
  }
  func.func @transform_2(%arg0: i32, %arg1: i32) -> (i32, i32) {
    %c1_i32 = arith.constant 1 : i32
    %0 = arith.muli %arg0, %c1_i32 : i32
    %1 = arith.addi %0, %arg1 : i32
    %c0_i32 = arith.constant 0 : i32
    %2 = arith.minsi %1, %c0_i32 : i32
    %c0_i32_0 = arith.constant 0 : i32
    %c0_i32_1 = arith.constant 0 : i32
    return %2, %c0_i32_0 : i32, i32
  }
  func.func @transform_3(%arg0: i32, %arg1: i32) -> (i32, i32) {
    %c1_i32 = arith.constant 1 : i32
    %0 = arith.muli %arg0, %c1_i32 : i32
    %1 = arith.addi %0, %arg1 : i32
    %c0_i32 = arith.constant 0 : i32
    %2 = arith.minsi %1, %c0_i32 : i32
    %c0_i32_0 = arith.constant 0 : i32
    %c0_i32_1 = arith.constant 0 : i32
    return %2, %c0_i32_0 : i32, i32
  }
  func.func @transform_4(%arg0: i32, %arg1: i32) -> (i32, i32, i32, i32) {
    %c0_i32 = arith.constant 0 : i32
    %c0_i32_0 = arith.constant 0 : i32
    %c0_i32_1 = arith.constant 0 : i32
    %c0_i32_2 = arith.constant 0 : i32
    return %arg0, %c0_i32, %c0_i32_0, %c0_i32_1 : i32, i32, i32, i32
  }
}

</mosaic_0001>

<llo_original>
// kernel: tpu_custom_call.1
$region0: #{tpu_custom_call.1}
  #allocation0 [shape = 'u32[]', space=smem, size = 0x4, offset = 0x4, fixed_abs, tag = 'smem constant byte address 0x4 - core index']
  #allocation1 [shape = 'u32[144,128]{1,0:T(1,128)}', space=vmem, size = 0x12000, scoped, tag = 'internal scratch']
  %s0 = inlined_call_operand.hbm [shape: f32[1,512], index: 0, kind: input, shape index: {}]
  %s1 = inlined_call_operand.hbm [shape: f32[1,512], index: 1, kind: input, shape index: {}]
  %s2 = inlined_call_operand.vmem [shape: f32[1,512], index: 2, kind: input, shape index: {}]
  %s3 = inlined_call_operand.vmem [shape: f32[1,512], index: 3, kind: input, shape index: {}]
  %s4 = inlined_call_operand.hbm [shape: f32[2,5,1,512], index: 4, kind: output, shape index: {}]
  %s5 = sld [smem:[#allocation0]]
  $region61: #{tpu_custom_call.1} parent=0
    _
  %s7 = ssub.s32 1, %s5
  %s8 = scalar_select 0, %s7, %s5
  $region1: #{tpu_custom_call.1} parent=0
    #allocation2 [shape = 'u8[4096]{0}', space=vmem, size = 0x1000, scoped, tag = 'input window, operand 0']
    #allocation3 [shape = 's32[2]{0}', space=sflag, size = 0x8, scoped, tag = 'scoped memory for tpu_custom_call.1']
    #allocation4 [shape = 's32[2]{0}', space=sflag, size = 0x8, scoped, tag = 'scoped memory for tpu_custom_call.1']
    #allocation5 [shape = 'u8[4096]{0}', space=vmem, size = 0x1000, scoped, tag = 'input window, operand 1']
    #allocation6 [shape = 's32[2]{0}', space=sflag, size = 0x8, scoped, tag = 'scoped memory for tpu_custom_call.1']
    #allocation7 [shape = 'u8[20480]{0}', space=vmem, size = 0x5000, scoped, tag = 'output window, operand 0']
    %9 = vsyncpa [#allocation3], 0
    %s10 = scalar_lea.sflag [#allocation3], 1
    %11 = vsyncpa %s10, 0
    %12 = vsyncpa [#allocation6], 0
    %s13 = scalar_lea.sflag [#allocation6], 1
    %14 = vsyncpa %s13, 0
    %15 = vsyncpa [#allocation4], 0
    %s16 = scalar_lea.sflag [#allocation4], 1
    %17 = vsyncpa %s16, 0
    loop: start=0, step=1, limit=4
    $region2: #{tpu_custom_call.1} parent=1 // loop_pre_header
      _
    $region3: #{tpu_custom_call.1} parent=1 // loop_header
      %s19 = sphi 0, %s23
      %p20 = scmp.ge.s32.totalorder %s19, 4
      %s26 = sphi 0, %s38
      %s27 = sphi 0, %s34
      %s28 = sphi 0, %s26
      %s29 = sphi 0, %s27
      %s30 = sphi 0, %s28
      %s31 = sphi 0, %s29
      %s47 = sphi 0, %s49
      %s50 = sphi 0, %s47
      %s51 = sphi 0, %s50
      %s67 = sphi 0, %s51
      %s79 = sphi 0, %s81
      %s82 = sphi 0, %s79
      %s83 = sphi 0, %s82
      %s99 = sphi 0, %s83
      %s111 = sphi 0, %s113
      %s114 = sphi 0, %s111
      %s115 = sphi 0, %s114
      %s131 = sphi 0, %s115
      %s143 = sphi 0, %s145
      %s146 = sphi 0, %s143
      %s147 = sphi 0, %s146
      %s163 = sphi 0, %s147
      %s169 = sphi 0, %s171
      %s172 = sphi 0, %s169
      %s173 = sphi 0, %s172
      %s189 = sphi 0, %s173
    $region4: #{tpu_custom_call.1} parent=1 // loop_header_branch
      %22 = sbr.rel (%p20) target = $region8
    $region5: #{tpu_custom_call.1} parent=1 // loop_body
      %s24 = ssub.s32 %s19, 1
      %s25 = ssub.s32 %s19, 2
      %s32 = sadd.s32 1, %s27
      %p33 = scmp.ge.s32.totalorder %s32, 1
      %s34 = scalar_select %p33, 0, %s32
      %s35 = sadd.s32 1, %s26
      %s36 = scalar_select %p33, %s35, %s26
      %p37 = scmp.ge.s32.totalorder %s36, 2
      %s38 = scalar_select %p37, 0, %s36
      %s39 = sadd.s32 %s26, %s27
      %p40 = scmp.lt.s32.totalorder %s39, 0
      %s41 = scalar_select %p40, %s39, 0
      %s42 = sadd.s32 %s38, %s34
      %p43 = scmp.lt.s32.totalorder %s42, 0
      %s44 = scalar_select %p43, %s42, 0
      %s45 = ssub.s32 %s41, %s44
      %p46 = scmp.eq.s32.totalorder %s45, 0
      %s48 = sadd.s32 %s47, 1
      %s49 = scalar_select %p46, %s47, %s48
      %p52 = pneg %p46
      %p53 = scmp.eq.s32.totalorder %s19, 1
      %p54 = por %p52, %p53
      %p55 = scmp.ne.s32.totalorder %s47, %s50
      %p56 = scmp.eq.s32.totalorder %s19, 0
      %p57 = por %p55, %p56
      %p58 = scmp.ne.s32.totalorder %s47, %s50
      %p59 = scmp.eq.s32.totalorder %s24, 1
      %p60 = por %p58, %p59
      %p61 = scmp.ne.s32.totalorder %s50, %s51
      %p62 = scmp.eq.s32.totalorder %s24, 0
      %p63 = por %p61, %p62
      %p64 = scmp.ne.s32.totalorder %s50, %s51
      %p65 = scmp.eq.s32.totalorder %s25, 1
      %p66 = por %p64, %p65
      %p68 = scmp.ne.s32.totalorder %s51, %s67
      %p69 = scmp.eq.s32.totalorder %s25, 0
      %p70 = por %p68, %p69
      %s71 = sadd.s32 %s26, %s27
      %p72 = scmp.lt.s32.totalorder %s71, 0
      %s73 = scalar_select %p72, %s71, 0
      %s74 = sadd.s32 %s38, %s34
      %p75 = scmp.lt.s32.totalorder %s74, 0
      %s76 = scalar_select %p75, %s74, 0
      %s77 = ssub.s32 %s73, %s76
      %p78 = scmp.eq.s32.totalorder %s77, 0
      %s80 = sadd.s32 %s79, 1
      %s81 = scalar_select %p78, %s79, %s80
      %p84 = pneg %p78
      %p85 = scmp.eq.s32.totalorder %s19, 1
      %p86 = por %p84, %p85
      %p87 = scmp.ne.s32.totalorder %s79, %s82
      %p88 = scmp.eq.s32.totalorder %s19, 0
      %p89 = por %p87, %p88
      %p90 = scmp.ne.s32.totalorder %s79, %s82
      %p91 = scmp.eq.s32.totalorder %s24, 1
      %p92 = por %p90, %p91
      %p93 = scmp.ne.s32.totalorder %s82, %s83
      %p94 = scmp.eq.s32.totalorder %s24, 0
      %p95 = por %p93, %p94
      %p96 = scmp.ne.s32.totalorder %s82, %s83
      %p97 = scmp.eq.s32.totalorder %s25, 1
      %p98 = por %p96, %p97
      %p100 = scmp.ne.s32.totalorder %s83, %s99
      %p101 = scmp.eq.s32.totalorder %s25, 0
      %p102 = por %p100, %p101
      %s103 = sadd.s32 %s26, %s27
      %p104 = scmp.lt.s32.totalorder %s103, 0
      %s105 = scalar_select %p104, %s103, 0
      %s106 = sadd.s32 %s38, %s34
      %p107 = scmp.lt.s32.totalorder %s106, 0
      %s108 = scalar_select %p107, %s106, 0
      %s109 = ssub.s32 %s105, %s108
      %p110 = scmp.eq.s32.totalorder %s109, 0
      %s112 = sadd.s32 %s111, 1
      %s113 = scalar_select %p110, %s111, %s112
      %p116 = pneg %p110
      %p117 = scmp.eq.s32.totalorder %s19, 1
      %p118 = por %p116, %p117
      %p119 = scmp.ne.s32.totalorder %s111, %s114
      %p120 = scmp.eq.s32.totalorder %s19, 0
      %p121 = por %p119, %p120
      %p122 = scmp.ne.s32.totalorder %s111, %s114
      %p123 = scmp.eq.s32.totalorder %s24, 1
      %p124 = por %p122, %p123
      %p125 = scmp.ne.s32.totalorder %s114, %s115
      %p126 = scmp.eq.s32.totalorder %s24, 0
      %p127 = por %p125, %p126
      %p128 = scmp.ne.s32.totalorder %s114, %s115
      %p129 = scmp.eq.s32.totalorder %s25, 1
      %p130 = por %p128, %p129
      %p132 = scmp.ne.s32.totalorder %s115, %s131
      %p133 = scmp.eq.s32.totalorder %s25, 0
      %p134 = por %p132, %p133
      %s135 = sadd.s32 %s26, %s27
      %p136 = scmp.lt.s32.totalorder %s135, 0
      %s137 = scalar_select %p136, %s135, 0
      %s138 = sadd.s32 %s38, %s34
      %p139 = scmp.lt.s32.totalorder %s138, 0
      %s140 = scalar_select %p139, %s138, 0
      %s141 = ssub.s32 %s137, %s140
      %p142 = scmp.eq.s32.totalorder %s141, 0
      %s144 = sadd.s32 %s143, 1
      %s145 = scalar_select %p142, %s143, %s144
      %p148 = pneg %p142
      %p149 = scmp.eq.s32.totalorder %s19, 1
      %p150 = por %p148, %p149
      %p151 = scmp.ne.s32.totalorder %s143, %s146
      %p152 = scmp.eq.s32.totalorder %s19, 0
      %p153 = por %p151, %p152
      %p154 = scmp.ne.s32.totalorder %s143, %s146
      %p155 = scmp.eq.s32.totalorder %s24, 1
      %p156 = por %p154, %p155
      %p157 = scmp.ne.s32.totalorder %s146, %s147
      %p158 = scmp.eq.s32.totalorder %s24, 0
      %p159 = por %p157, %p158
      %p160 = scmp.ne.s32.totalorder %s146, %s147
      %p161 = scmp.eq.s32.totalorder %s25, 1
      %p162 = por %p160, %p161
      %p164 = scmp.ne.s32.totalorder %s147, %s163
      %p165 = scmp.eq.s32.totalorder %s25, 0
      %p166 = por %p164, %p165
      %s167 = ssub.s32 %s26, %s38
      %p168 = scmp.eq.s32.totalorder %s167, 0
      %s170 = sadd.s32 %s169, 1
      %s171 = scalar_select %p168, %s169, %s170
      %p174 = pneg %p168
      %p175 = scmp.eq.s32.totalorder %s19, 1
      %p176 = por %p174, %p175
      %p177 = scmp.ne.s32.totalorder %s169, %s172
      %p178 = scmp.eq.s32.totalorder %s19, 0
      %p179 = por %p177, %p178
      %p180 = scmp.ne.s32.totalorder %s169, %s172
      %p181 = scmp.eq.s32.totalorder %s24, 1
      %p182 = por %p180, %p181
      %p183 = scmp.ne.s32.totalorder %s172, %s173
      %p184 = scmp.eq.s32.totalorder %s24, 0
      %p185 = por %p183, %p184
      %p186 = scmp.ne.s32.totalorder %s172, %s173
      %p187 = scmp.eq.s32.totalorder %s25, 1
      %p188 = por %p186, %p187
      %p190 = scmp.ne.s32.totalorder %s173, %s189
      %p191 = scmp.eq.s32.totalorder %s25, 0
      %p192 = por %p190, %p191
      %p193 = scmp.le.s32.totalorder 1, %s19
      %p194 = scmp.lt.s32.totalorder %s19, 3
      %p195 = pnand %p193, %p194
      %p196 = pneg %p195
      // Predicated region
      $region9: #{tpu_custom_call.1} parent=5 // pred_check
        _
      $region10: #{tpu_custom_call.1} parent=5 // pred_check_branch
        %198 = sbr.rel (%p195) target = $region12
      $region11: #{tpu_custom_call.1} parent=5 // pred_region
        %s199 = ssub.s32 %s19, 1
      $region12: #{tpu_custom_call.1} parent=5 // pred_fallthru
        _
      %p200 = scmp.lt.s32.totalorder %s19, 2
      // Predicated region
      $region13: #{tpu_custom_call.1} parent=5 // pred_check
        %p201 = pneg %p200
      $region14: #{tpu_custom_call.1} parent=5 // pred_check_branch
        %203 = sbr.rel (%p201) target = $region16
      $region15: #{tpu_custom_call.1} parent=5 // pred_region
        // Predicated region
        $region17: #{tpu_custom_call.1} parent=15 // pred_check
          %p204 = pneg %p57
        $region18: #{tpu_custom_call.1} parent=15 // pred_check_branch
          %206 = sbr.rel (%p204) target = $region20
        $region19: #{tpu_custom_call.1} parent=15 // pred_region
          %s207 = sand.u32 %s47, 1
          %s208 = scalar_lea.sflag [#allocation3], %s207
          %s209 = sand.u32 %s47, 1
          %s210 = smul.addr %s209, 4
          %s211 = scalar_lea.vmem [#allocation2], %s210
          %s212 = sadd.s32 %s26, %s27
          %p213 = scmp.lt.s32.totalorder %s212, 0
          %s214 = scalar_select %p213, %s212, 0
          %s216 = ssub.s32 64, 64
          %217 = vsyncadd %s208, %s216
          %s218 = smul.addr %s214, 4
          %s219 = smul.addr %s218, 16
          %s220 = scalar_lea.hbm %s0, %s219
          %s222 = sshll.u32 %s211, 4
          %s223 = int_to_ptr.vmem [resolvable:$true] %s222
          %225 = dma.hbm_to_vmem [thread:$0]  %s220, 64, %s223, %s208
        $region20: #{tpu_custom_call.1} parent=15 // pred_fallthru
          _
        // Predicated region
        $region21: #{tpu_custom_call.1} parent=15 // pred_check
          %p226 = pneg %p89
        $region22: #{tpu_custom_call.1} parent=15 // pred_check_branch
          %228 = sbr.rel (%p226) target = $region24
        $region23: #{tpu_custom_call.1} parent=15 // pred_region
          %s229 = sand.u32 %s79, 1
          %s230 = scalar_lea.sflag [#allocation6], %s229
          %s231 = sand.u32 %s79, 1
          %s232 = smul.addr %s231, 4
          %s233 = scalar_lea.vmem [#allocation5], %s232
          %s234 = sadd.s32 %s26, %s27
          %p235 = scmp.lt.s32.totalorder %s234, 0
          %s236 = scalar_select %p235, %s234, 0
          %s238 = ssub.s32 64, 64
          %239 = vsyncadd %s230, %s238
          %s240 = smul.addr %s236, 4
          %s241 = smul.addr %s240, 16
          %s242 = scalar_lea.hbm %s1, %s241
          %s244 = sshll.u32 %s233, 4
          %s245 = int_to_ptr.vmem [resolvable:$true] %s244
          %247 = dma.hbm_to_vmem [thread:$0]  %s242, 64, %s245, %s230
        $region24: #{tpu_custom_call.1} parent=15 // pred_fallthru
          _
        // Predicated region
        $region25: #{tpu_custom_call.1} parent=15 // pred_check
          %p248 = pneg %p121
        $region26: #{tpu_custom_call.1} parent=15 // pred_check_branch
          %250 = sbr.rel (%p248) target = $region28
        $region27: #{tpu_custom_call.1} parent=15 // pred_region
          %s251 = sadd.s32 %s26, %s27
          %p252 = scmp.lt.s32.totalorder %s251, 0
          %s253 = scalar_select %p252, %s251, 0
          %p254 = scmp.lt.s32.totalorder %s253, 0
          %s255 = scalar_select %p254, %s253, 0
          %s256 = smul.addr %s255, 4
          %s257 = scalar_lea.vmem %s2, %s256
          %s258 = sadd.s32 %s26, %s27
          %p259 = scmp.lt.s32.totalorder %s258, 0
          %s260 = scalar_select %p259, %s258, 0
        $region28: #{tpu_custom_call.1} parent=15 // pred_fallthru
          _
        // Predicated region
        $region29: #{tpu_custom_call.1} parent=15 // pred_check
          %p261 = pneg %p153
        $region30: #{tpu_custom_call.1} parent=15 // pred_check_branch
          %263 = sbr.rel (%p261) target = $region32
        $region31: #{tpu_custom_call.1} parent=15 // pred_region
          %s264 = sadd.s32 %s26, %s27
          %p265 = scmp.lt.s32.totalorder %s264, 0
          %s266 = scalar_select %p265, %s264, 0
          %p267 = scmp.lt.s32.totalorder %s266, 0
          %s268 = scalar_select %p267, %s266, 0
          %s269 = smul.addr %s268, 4
          %s270 = scalar_lea.vmem %s3, %s269
          %s271 = sadd.s32 %s26, %s27
          %p272 = scmp.lt.s32.totalorder %s271, 0
          %s273 = scalar_select %p272, %s271, 0
        $region32: #{tpu_custom_call.1} parent=15 // pred_fallthru
          _
      $region16: #{tpu_custom_call.1} parent=5 // pred_fallthru
        _
      %p274 = scmp.le.s32.totalorder 1, %s19
      %p275 = scmp.lt.s32.totalorder %s19, 3
      %p276 = pnand %p274, %p275
      %p277 = pneg %p276
      // Predicated region
      $region33: #{tpu_custom_call.1} parent=5 // pred_check
        _
      $region34: #{tpu_custom_call.1} parent=5 // pred_check_branch
        %279 = sbr.rel (%p276) target = $region36
      $region35: #{tpu_custom_call.1} parent=5 // pred_region
        %s280 = ssub.s32 %s19, 1
        %s281 = sand.u32 %s50, 1
        %s282 = scalar_lea.sflag [#allocation3], %s281
        %s283 = sand.u32 %s50, 1
        %s284 = smul.addr %s283, 4
        %s285 = scalar_lea.vmem [#allocation2], %s284
        // Predicated region
        $region37: #{tpu_custom_call.1} parent=35 // pred_check
          %p286 = pneg %p63
        $region38: #{tpu_custom_call.1} parent=35 // pred_check_branch
          %288 = sbr.rel (%p286) target = $region40
        $region39: #{tpu_custom_call.1} parent=35 // pred_region
          %289 = dma.done %s282, 64
        $region40: #{tpu_custom_call.1} parent=35 // pred_fallthru
          _
        %s290 = sand.u32 %s82, 1
        %s291 = scalar_lea.sflag [#allocation6], %s290
        %s292 = sand.u32 %s82, 1
        %s293 = smul.addr %s292, 4
        %s294 = scalar_lea.vmem [#allocation5], %s293
        // Predicated region
        $region41: #{tpu_custom_call.1} parent=35 // pred_check
          %p295 = pneg %p95
        $region42: #{tpu_custom_call.1} parent=35 // pred_check_branch
          %297 = sbr.rel (%p295) target = $region44
        $region43: #{tpu_custom_call.1} parent=35 // pred_region
          %298 = dma.done %s291, 64
        $region44: #{tpu_custom_call.1} parent=35 // pred_fallthru
          _
        %s299 = sand.u32 %s50, 1
        %s300 = scalar_lea.sflag [#allocation3], %s299
        %s301 = sand.u32 %s50, 1
        %s302 = smul.addr %s301, 4
        %s303 = scalar_lea.vmem [#allocation2], %s302
        %p304 = pneg %p63
        %p305 = pneg %p60
        %s306 = sand.u32 %s82, 1
        %s307 = scalar_lea.sflag [#allocation6], %s306
        %s308 = sand.u32 %s82, 1
        %s309 = smul.addr %s308, 4
        %s310 = scalar_lea.vmem [#allocation5], %s309
        %p311 = pneg %p95
        %p312 = pneg %p92
        %s313 = sadd.s32 %s28, %s29
        %p314 = scmp.lt.s32.totalorder %s313, 0
        %s315 = scalar_select %p314, %s313, 0
        %p316 = scmp.lt.s32.totalorder %s315, 0
        %s317 = scalar_select %p316, %s315, 0
        %s318 = smul.addr %s317, 4
        %s319 = scalar_lea.vmem %s2, %s318
        %p320 = pneg %p127
        %p321 = pneg %p124
        %s322 = sadd.s32 %s28, %s29
        %p323 = scmp.lt.s32.totalorder %s322, 0
        %s324 = scalar_select %p323, %s322, 0
        %p325 = scmp.lt.s32.totalorder %s324, 0
        %s326 = scalar_select %p325, %s324, 0
        %s327 = smul.addr %s326, 4
        %s328 = scalar_lea.vmem %s3, %s327
        %p329 = pneg %p159
        %p330 = pneg %p156
        %p331 = pneg %p185
        %p332 = pneg %p182
        %s333 = sand.u32 %s172, 1
        %s334 = scalar_lea.sflag [#allocation4], %s333
        %s335 = sand.u32 %s172, 1
        %s336 = smul.addr %s335, 20
        %s337 = scalar_lea.vmem [#allocation7], %s336
        %s338 = sadd.s32 %s28, %s29
        %p339 = scmp.lt.s32.totalorder %s338, 0
        %s340 = scalar_select %p339, %s338, 0
        %s341 = sadd.s32 %s28, %s29
        %p342 = scmp.lt.s32.totalorder %s341, 0
        %s343 = scalar_select %p342, %s341, 0
        %s344 = sadd.s32 %s28, %s29
        %p345 = scmp.lt.s32.totalorder %s344, 0
        %s346 = scalar_select %p345, %s344, 0
        %p347 = scmp.lt.s32.totalorder %s346, 0
        %s348 = scalar_select %p347, %s346, 0
        %s349 = smul.addr %s348, 4
        %s350 = scalar_lea.vmem %s2, %s349
        %s351 = sadd.s32 %s28, %s29
        %p352 = scmp.lt.s32.totalorder %s351, 0
        %s353 = scalar_select %p352, %s351, 0
        %s354 = sadd.s32 %s28, %s29
        %p355 = scmp.lt.s32.totalorder %s354, 0
        %s356 = scalar_select %p355, %s354, 0
        %p357 = scmp.lt.s32.totalorder %s356, 0
        %s358 = scalar_select %p357, %s356, 0
        %s359 = smul.addr %s358, 4
        %s360 = scalar_lea.vmem %s3, %s359
        %s361 = sadd.s32 %s28, %s29
        %p362 = scmp.lt.s32.totalorder %s361, 0
        %s363 = scalar_select %p362, %s361, 0
        %p364 = scmp.eq.s32.totalorder %s29, 0
        // Predicated region
        $region45: #{tpu_custom_call.1} parent=35 // pred_check
          %p365 = pneg %p364
        $region46: #{tpu_custom_call.1} parent=35 // pred_check_branch
          %367 = sbr.rel (%p365) target = $region48
        $region47: #{tpu_custom_call.1} parent=35 // pred_region
          %v368 = vlaneseq
          %vm369 = vcmp.ge.s32.totalorder %v368, 0
          %vm370 = vcmp.lt.s32.totalorder %v368, 512
          %vm371 = vmand %vm369, %vm370
          %372 = vst.msk [vmem:[%s337] sm:$0xf] %vm371, 0.0
          %373 = vst.msk [vmem:[%s337 + $0x4] sm:$0xf] %vm371, 0.0
          %374 = vst.msk [vmem:[%s337 + $0x8] sm:$0xf] %vm371, 0.0
          %375 = vst.msk [vmem:[%s337 + $0xc] sm:$0xf] %vm371, 0.0
          %376 = vst.msk [vmem:[%s337 + $0x10] sm:$0xf] %vm371, 0.0
        $region48: #{tpu_custom_call.1} parent=35 // pred_fallthru
          _
        %v377 = vld [vmem:[%s285] sm:$0xf]
        %v378 = vld [vmem:[%s294] sm:$0xf]
        %v379 = vld [vmem:[%s350] sm:$0xf]
        %v380 = vld [vmem:[%s360] sm:$0xf]
        %s381 = sadd.s32 %s28, %s29
        %p382 = scmp.lt.s32.totalorder %s381, 1
        %s383 = scalar_select %p382, 1, 0
        %v384 = vstv %s383
        %vm385 = vcmp.eq.s32.totalorder %v384, 1
        %v386 = vsel %vm385, %v377, 0.0
        %v387 = vsel %vm385, %v378, 0.0
        %v388 = vsel %vm385, %v379, 0.0
        %v389 = vsel %vm385, %v380, 0.0
        %v390 = vmul.f32 %v388, %v389
        %v391 = vld [vmem:[%s337] sm:$0xf]
        %v392 = vmul.f32 %v386, %v390
        %v393 = vadd.f32 %v391, %v392
        %v394 = vlaneseq
        %vm395 = vcmp.ge.s32.totalorder %v394, 0
        %vm396 = vcmp.lt.s32.totalorder %v394, 512
        %vm397 = vmand %vm395, %vm396
        %398 = vst.msk [vmem:[%s337] sm:$0xf] %vm397, %v393
        %s399 = scalar_lea.vmem %s337, 4 [#allocation7]
        %v400 = vld [vmem:[%s399] sm:$0xf]
        %v401 = vmul.f32 %v386, %v389
        %v402 = vadd.f32 %v400, %v401
        %403 = vst.msk [vmem:[%s399] sm:$0xf] %vm397, %v402
        %s404 = scalar_lea.vmem %s337, 8 [#allocation7]
        %v405 = vld [vmem:[%s404] sm:$0xf]
        %v406 = vadd.f32 %v405, %v390
        %407 = vst.msk [vmem:[%s404] sm:$0xf] %vm397, %v406
        %s408 = scalar_lea.vmem %s337, 12 [#allocation7]
        %v409 = vld [vmem:[%s408] sm:$0xf]
        %v410 = vmul.f32 %v387, %v390
        %v411 = vadd.f32 %v409, %v410
        %412 = vst.msk [vmem:[%s408] sm:$0xf] %vm397, %v411
        %s413 = scalar_lea.vmem %s337, 16 [#allocation7]
        %v414 = vld [vmem:[%s413] sm:$0xf]
        %v415 = vmul.f32 %v387, %v389
        %v416 = vadd.f32 %v414, %v415
        %417 = vst.msk [vmem:[%s413] sm:$0xf] %vm397, %v416
        %s418 = sand.u32 %s172, 1
        %s419 = scalar_lea.sflag [#allocation4], %s418
        %s420 = sand.u32 %s172, 1
        %s421 = smul.addr %s420, 20
        %s422 = scalar_lea.vmem [#allocation7], %s421
        // Predicated region
        $region49: #{tpu_custom_call.1} parent=35 // pred_check
          %p423 = pneg %p182
        $region50: #{tpu_custom_call.1} parent=35 // pred_check_branch
          %425 = sbr.rel (%p423) target = $region52
        $region51: #{tpu_custom_call.1} parent=35 // pred_region
          %s427 = ssub.s32 320, 320
          %428 = vsyncadd %s419, %s427
          %s429 = smul.addr %s28, 20
          %s430 = smul.addr %s429, 16
          %s431 = scalar_lea.hbm %s4, %s430
          %s432 = sshll.u32 %s422, 4
          %s433 = int_to_ptr.vmem [resolvable:$true] %s432
          %438 = dma.vmem_to_hbm [thread:$0]  %s433, 320, %s431, %s419, 64, 64, 4
        $region52: #{tpu_custom_call.1} parent=35 // pred_fallthru
          _
      $region36: #{tpu_custom_call.1} parent=5 // pred_fallthru
        _
      %p439 = scmp.le.s32.totalorder 2, %s19
      // Predicated region
      $region53: #{tpu_custom_call.1} parent=5 // pred_check
        %p440 = pneg %p439
      $region54: #{tpu_custom_call.1} parent=5 // pred_check_branch
        %442 = sbr.rel (%p440) target = $region56
      $region55: #{tpu_custom_call.1} parent=5 // pred_region
        %s443 = ssub.s32 %s19, 2
        // Predicated region
        $region57: #{tpu_custom_call.1} parent=55 // pred_check
          %p444 = pneg %p188
        $region58: #{tpu_custom_call.1} parent=55 // pred_check_branch
          %446 = sbr.rel (%p444) target = $region60
        $region59: #{tpu_custom_call.1} parent=55 // pred_region
          %s447 = sand.u32 %s173, 1
          %s448 = scalar_lea.sflag [#allocation4], %s447
          %s449 = sand.u32 %s173, 1
          %s450 = smul.addr %s449, 20
          %s451 = scalar_lea.vmem [#allocation7], %s450
          %452 = dma.done %s448, 320
        $region60: #{tpu_custom_call.1} parent=55 // pred_fallthru
          _
      $region56: #{tpu_custom_call.1} parent=5 // pred_fallthru
        _
    $region6: #{tpu_custom_call.1} parent=1 // loop_footer
      %s23 = sadd.s32 1, %s19
    $region7: #{tpu_custom_call.1} parent=1 // loop_footer_branch
      %18 = sbr.rel target = $region3
    $region8: #{tpu_custom_call.1} parent=1 // loop_exit
      _
    %453 = vsyncpa [#allocation3], 1
    %s454 = scalar_lea.sflag [#allocation3], 1
    %455 = vsyncpa %s454, 1
    %456 = vsyncpa [#allocation6], 1
    %s457 = scalar_lea.sflag [#allocation6], 1
    %458 = vsyncpa %s457, 1
    %459 = vsyncpa [#allocation4], 1
    %s460 = scalar_lea.sflag [#allocation4], 1
    %461 = vsyncpa %s460, 1

</llo_original>
